<compile_context>
chip_gen: v6e
topology: v6e:2x2x1
jax: 0.10.0
libtpu: 0.0.40
codegen_flags: <defaults>
</compile_context>

<pallas_src>
import math

import jax
import jax.numpy as jnp
from jax.experimental import pallas as pl
from jax.experimental.pallas import tpu as pltpu


# ----------------------------- Pallas kernels ------------------------------- #
def _ffn_kernel_resident(x_ref, w1_ref, b1_ref, w2_ref, b2_ref, o_ref):
    """y = relu(x @ W1 + b1) @ W2 + b2 with fully VMEM-resident weights."""
    h = jnp.dot(x_ref[...], w1_ref[...], preferred_element_type=jnp.float32)
    h = jnp.maximum(h + b1_ref[...], 0.0)
    # TODO(synk): nn.Dropout(p=0.1) treated as inference-mode identity.
    y = jnp.dot(h.astype(w2_ref.dtype), w2_ref[...],
                preferred_element_type=jnp.float32)
    o_ref[...] = (y + b2_ref[...]).astype(o_ref.dtype)


def _ffn_kernel_reduce(x_ref, w1_ref, b1_ref, w2_ref, b2_ref, o_ref, acc_ref):
    """One (row-tile, d_ff-tile) reduction step of the same FFN."""
    j = pl.program_id(1)

    h = jnp.dot(x_ref[...], w1_ref[...], preferred_element_type=jnp.float32)
    h = jnp.maximum(h + b1_ref[...], 0.0)
    # TODO(synk): nn.Dropout(p=0.1) treated as inference-mode identity.
    part = jnp.dot(h.astype(w2_ref.dtype), w2_ref[...],
                   preferred_element_type=jnp.float32)

    @pl.when(j == 0)
    def _():
        # Output bias folded into the first accumulation (no separate seed store).
        acc_ref[...] = part + b2_ref[...]

    @pl.when(j > 0)
    def _():
        acc_ref[...] += part

    @pl.when(j == pl.num_programs(1) - 1)
    def _():
        o_ref[...] = acc_ref[...].astype(o_ref.dtype)


# ------------------------------- helpers ------------------------------------ #
def _round_up(a, b):
    return (a + b - 1) // b * b


def _pad2d(a, rows, cols):
    r, c = a.shape
    if r == rows and c == cols:
        return a
    return jnp.pad(a, ((0, rows - r), (0, cols - c)))


def _pick_block_f(dfp, target):
    """Largest multiple of 128 that divides dfp and is <= max(128, target)."""
    target = max(128, min(int(target), dfp))
    best = 128
    for cand in range(128, target + 1, 128):
        if dfp % cand == 0:
            best = cand
    return best


def _vmem_capacity_bytes():
    try:
        return int(pltpu.get_tpu_info().vmem_capacity_bytes)
    except Exception:
        return 64 * 1024 * 1024  # conservative (v7x per-TensorCore)


# ------------------------------- wrapper ------------------------------------ #
def positionwise_feed_forward(x, w1, b1, w2, b2, *,
                              block_m=256, block_f=512,
                              compute_dtype=jnp.bfloat16,
                              allow_resident_weights=True):
    """Fused FFN:  y = relu(x @ w1 + b1) @ w2 + b2.

    x  : (..., d_model)
    w1 : (d_model, d_ff),  b1 : (d_ff,)
    w2 : (d_ff, d_model),  b2 : (d_model,)
    compute_dtype: MXU operand dtype (default bf16); accumulation is f32 and
                   the output keeps x.dtype. Pass jnp.float32 (or None) for a
                   full-precision path.
    """
    orig_shape = x.shape
    d_model, d_ff = w1.shape
    assert x.shape[-1] == d_model and w2.shape == (d_ff, d_model)
    assert b1.shape == (d_ff,) and b2.shape == (d_model,)

    out_dtype = x.dtype
    cdt = jnp.dtype(compute_dtype) if compute_dtype is not None else jnp.dtype(x.dtype)
    c_item = cdt.itemsize
    o_item = jnp.dtype(out_dtype).itemsize

    # ------ layout plumbing in the wrapper; the kernels are reshape-free -----
    m = math.prod(orig_shape[:-1])
    x2 = x.reshape(m, d_model)

    dmp = _round_up(d_model, 128)            # lane-dense feature dims
    dfp = _round_up(d_ff, 128)

    # bf16 (or bf16 output) needs (16,128) sublane tiling; f32-only can use 8.
    sublane = 8 if (c_item == 4 and o_item == 4) else 16
    block_m = max(sublane,
                  _round_up(min(block_m, _round_up(m, sublane)), sublane))
    block_f = _pick_block_f(dfp, block_f)

    vmem_cap = _vmem_capacity_bytes()
    vmem_budget = int(0.6 * vmem_cap)        # decision budget (Mosaic headroom)

    def resident_bytes(bm):
        return (2 * bm * dmp * c_item                 # x tile (double-buffered)
                + 2 * dmp * dfp * c_item              # W1 (resident)
                + 2 * dfp * dmp * c_item              # W2 (resident)
                + 2 * 8 * dfp * 4 + 2 * 8 * dmp * 4   # biases (f32, sublane pad)
                + 2 * bm * dmp * o_item               # out tile
                + bm * dfp * 4)                       # live f32 hidden

    def reduce_bytes(bm, bf):
        return (2 * bm * dmp * c_item
                + 2 * dmp * bf * c_item + 2 * bf * dmp * c_item
                + 2 * 8 * bf * 4 + 2 * 8 * dmp * 4
                + 2 * bm * dmp * o_item
                + bm * dmp * 4                        # f32 accumulator scratch
                + bm * bf * 4)                        # live f32 hidden

    use_resident = allow_resident_weights and resident_bytes(block_m) <= vmem_budget

    if not use_resident:
        # Shrink block_f first, then block_m, until the reduction tiling fits.
        while reduce_bytes(block_m, block_f) > vmem_budget and block_f > 128:
            block_f = _pick_block_f(dfp, block_f // 2)
        while reduce_bytes(block_m, block_f) > vmem_budget and block_m > sublane:
            block_m = max(sublane, _round_up(block_m // 2, sublane))

    mp = _round_up(m, block_m)
    n_row_tiles = mp // block_m

    xp = _pad2d(x2, mp, dmp).astype(cdt)
    w1p = _pad2d(w1, dmp, dfp).astype(cdt)
    w2p = _pad2d(w2, dfp, dmp).astype(cdt)
    b1p = _pad2d(b1.reshape(1, d_ff).astype(jnp.float32), 1, dfp)
    b2p = _pad2d(b2.reshape(1, d_model).astype(jnp.float32), 1, dmp)

    # Advisory cost model (accounts for per-row-tile weight re-reads).
    weight_reads = 1 if use_resident else n_row_tiles
    cost = pl.CostEstimate(
        flops=4 * m * d_model * d_ff,
        transcendentals=0,
        bytes_accessed=int(c_item * mp * dmp                  # x read
                           + o_item * mp * dmp                # y write
                           + weight_reads * c_item * 2 * dmp * dfp
                           + 4 * (dfp + dmp)),                # biases
    )

    need = resident_bytes(block_m) if use_resident else reduce_bytes(block_m, block_f)
    vmem_limit = min(max(int(1.5 * need), 16 * 1024 * 1024), int(0.75 * vmem_cap))

    if use_resident:
        grid_spec = pltpu.PrefetchScalarGridSpec(
            num_scalar_prefetch=0,
            grid=(n_row_tiles,),
            in_specs=[
                pl.BlockSpec((block_m, dmp), lambda i: (i, 0)),  # x row tile
                pl.BlockSpec((dmp, dfp), lambda i: (0, 0)),      # W1 (resident)
                pl.BlockSpec((1, dfp), lambda i: (0, 0)),        # b1
                pl.BlockSpec((dfp, dmp), lambda i: (0, 0)),      # W2 (resident)
                pl.BlockSpec((1, dmp), lambda i: (0, 0)),        # b2
            ],
            out_specs=pl.BlockSpec((block_m, dmp), lambda i: (i, 0)),
        )
        kernel = _ffn_kernel_resident
        dim_sem = ("parallel",)
    else:
        grid_spec = pltpu.PrefetchScalarGridSpec(
            num_scalar_prefetch=0,
            grid=(n_row_tiles, dfp // block_f),
            in_specs=[
                pl.BlockSpec((block_m, dmp), lambda i, j: (i, 0)),   # x rows
                pl.BlockSpec((dmp, block_f), lambda i, j: (0, j)),   # W1 col tile
                pl.BlockSpec((1, block_f), lambda i, j: (0, j)),     # b1 tile
                pl.BlockSpec((block_f, dmp), lambda i, j: (j, 0)),   # W2 row tile
                pl.BlockSpec((1, dmp), lambda i, j: (0, 0)),         # b2
            ],
            out_specs=pl.BlockSpec((block_m, dmp), lambda i, j: (i, 0)),
            scratch_shapes=[pltpu.VMEM((block_m, dmp), jnp.float32)],
        )
        kernel = _ffn_kernel_reduce
        dim_sem = ("parallel", "arbitrary")

    out_p = pl.pallas_call(
        kernel,
        out_shape=jax.ShapeDtypeStruct((mp, dmp), out_dtype),
        grid_spec=grid_spec,
        compiler_params=pltpu.CompilerParams(
            dimension_semantics=dim_sem,
            vmem_limit_bytes=vmem_limit,
        ),
        cost_estimate=cost,
    )(xp, w1p, b1p, w2p, b2p)

    out = out_p[:m, :d_model]
    return out.reshape(orig_shape[:-1] + (d_model,))


# --------------------------------- main -------------------------------------- #
if __name__ == "__main__":
    # Small, lane-dense transformer-FFN shapes.
    B, S, D_MODEL, D_FF = 2, 8, 128, 256

    key = jax.random.PRNGKey(0)
    kx, k1, k2, k3, k4 = jax.random.split(key, 5)
    bound1 = 1.0 / math.sqrt(D_MODEL)
    bound2 = 1.0 / math.sqrt(D_FF)

    x = jax.random.normal(kx, (B, S, D_MODEL), jnp.float32)
    w1 = jax.random.uniform(k1, (D_MODEL, D_FF), jnp.float32, -bound1, bound1)
    b1 = jax.random.uniform(k2, (D_FF,), jnp.float32, -bound1, bound1)
    w2 = jax.random.uniform(k3, (D_FF, D_MODEL), jnp.float32, -bound2, bound2)
    b2 = jax.random.uniform(k4, (D_MODEL,), jnp.float32, -bound2, bound2)

    # Pure-JAX reference (dropout == identity in eval mode).
    h_ref = jnp.maximum(
        jnp.dot(x, w1, precision=jax.lax.Precision.HIGHEST) + b1, 0.0
    )
    ref = jnp.dot(h_ref, w2, precision=jax.lax.Precision.HIGHEST) + b2

    # 1) Full-precision path (f32 MXU operands), resident-weight kernel.
    out_f32 = positionwise_feed_forward(x, w1, b1, w2, b2,
                                        compute_dtype=jnp.float32)
    jax.block_until_ready(out_f32)
    assert out_f32.shape == ref.shape
    err_f32 = float(jnp.max(jnp.abs(out_f32 - ref)))
    assert jnp.allclose(out_f32, ref, atol=1e-4, rtol=1e-4), f"f32 max_err={err_f32}"

    # 2) Full-precision path through the d_ff-reduction kernel (forced).
    out_red = positionwise_feed_forward(x, w1, b1, w2, b2,
                                        compute_dtype=jnp.float32,
                                        allow_resident_weights=False,
                                        block_f=128)
    jax.block_until_ready(out_red)
    err_red = float(jnp.max(jnp.abs(out_red - ref)))
    assert jnp.allclose(out_red, ref, atol=1e-4, rtol=1e-4), f"reduce max_err={err_red}"

    # 3) Default fast path: bf16 MXU operands, f32 accumulation (loosened tol).
    out_bf16 = positionwise_feed_forward(x, w1, b1, w2, b2)
    jax.block_until_ready(out_bf16)
    err_bf16 = float(jnp.max(jnp.abs(out_bf16 - ref)))
    assert jnp.allclose(out_bf16, ref, atol=3e-2, rtol=3e-2), f"bf16 max_err={err_bf16}"

    print("KERNEL_OK")
</pallas_src>

<mosaic_0001>
module attributes {stable_mosaic.version = 11 : i64} {
  func.func @_ffn_kernel_resident(%arg0: i32, %arg1: memref<16x128xf32, #tpu.memory_space<vmem>>, %arg2: memref<128x256xf32, #tpu.memory_space<vmem>>, %arg3: memref<1x256xf32, #tpu.memory_space<vmem>>, %arg4: memref<256x128xf32, #tpu.memory_space<vmem>>, %arg5: memref<1x128xf32, #tpu.memory_space<vmem>>, %arg6: memref<16x128xf32, #tpu.memory_space<vmem>>) attributes {dimension_semantics = [#tpu.dimension_semantics<parallel>], iteration_bounds = array<i64: 1>, scalar_prefetch = 0 : i64, scratch_operands = 0 : i64, tpu.core_type = #tpu.core_type<tc>, window_params = [{transform_indices = @transform_0, window_bounds = array<i64: 16, 128>}, {pipeline_mode = #tpu.pipeline_mode<synchronous>, transform_indices = @transform_1, window_bounds = array<i64: 128, 256>}, {pipeline_mode = #tpu.pipeline_mode<synchronous>, transform_indices = @transform_2, window_bounds = array<i64: 1, 256>}, {pipeline_mode = #tpu.pipeline_mode<synchronous>, transform_indices = @transform_3, window_bounds = array<i64: 256, 128>}, {pipeline_mode = #tpu.pipeline_mode<synchronous>, transform_indices = @transform_4, window_bounds = array<i64: 1, 128>}, {transform_indices = @transform_5, window_bounds = array<i64: 16, 128>}]} {
    %c0 = arith.constant 0 : index
    %c0_0 = arith.constant 0 : index
    %0 = vector.load %arg1[%c0, %c0_0] : memref<16x128xf32, #tpu.memory_space<vmem>>, vector<16x128xf32>
    %c0_1 = arith.constant 0 : index
    %c0_2 = arith.constant 0 : index
    %1 = vector.load %arg2[%c0_1, %c0_2] : memref<128x256xf32, #tpu.memory_space<vmem>>, vector<128x256xf32>
    %cst = arith.constant dense<0.000000e+00> : vector<16x256xf32>
    %2 = tpu.matmul %0, %1, %cst {dimension_numbers = #tpu.dot_dimension_numbers<[1], [0], [0], [1], [0, 0, 1, 1], [], []>} : vector<16x128xf32>, vector<128x256xf32>, vector<16x256xf32> -> vector<16x256xf32>
    %c0_3 = arith.constant 0 : index
    %c0_4 = arith.constant 0 : index
    %3 = vector.load %arg3[%c0_3, %c0_4] : memref<1x256xf32, #tpu.memory_space<vmem>>, vector<1x256xf32>
    %4 = vector.broadcast %3 : vector<1x256xf32> to vector<16x256xf32>
    %5 = arith.addf %2, %4 : vector<16x256xf32>
    %cst_5 = arith.constant 0.000000e+00 : f32
    %6 = vector.broadcast %cst_5 : f32 to vector<16x256xf32>
    %7 = arith.maximumf %5, %6 : vector<16x256xf32>
    %c0_6 = arith.constant 0 : index
    %c0_7 = arith.constant 0 : index
    %8 = vector.load %arg4[%c0_6, %c0_7] : memref<256x128xf32, #tpu.memory_space<vmem>>, vector<256x128xf32>
    %cst_8 = arith.constant dense<0.000000e+00> : vector<16x128xf32>
    %9 = tpu.matmul %7, %8, %cst_8 {dimension_numbers = #tpu.dot_dimension_numbers<[1], [0], [0], [1], [0, 0, 1, 1], [], []>} : vector<16x256xf32>, vector<256x128xf32>, vector<16x128xf32> -> vector<16x128xf32>
    %c0_9 = arith.constant 0 : index
    %c0_10 = arith.constant 0 : index
    %10 = vector.load %arg5[%c0_9, %c0_10] : memref<1x128xf32, #tpu.memory_space<vmem>>, vector<1x128xf32>
    %11 = vector.broadcast %10 : vector<1x128xf32> to vector<16x128xf32>
    %12 = arith.addf %9, %11 : vector<16x128xf32>
    %c0_11 = arith.constant 0 : index
    %c0_12 = arith.constant 0 : index
    %13 = vector.load %arg6[%c0_11, %c0_12] : memref<16x128xf32, #tpu.memory_space<vmem>>, vector<16x128xf32>
    tpu.vector_store %arg6[%c0_11, %c0_12], %12 {strides = array<i32>} : memref<16x128xf32, #tpu.memory_space<vmem>>, vector<16x128xf32>,
    return
  }
  func.func @transform_0(%arg0: i32) -> (i32, i32) {
    %c0_i32 = arith.constant 0 : i32
    %c0_i32_0 = arith.constant 0 : i32
    return %arg0, %c0_i32 : i32, i32
  }
  func.func @transform_1(%arg0: i32) -> (i32, i32) {
    %c0_i32 = arith.constant 0 : i32
    %c0_i32_0 = arith.constant 0 : i32
    %c0_i32_1 = arith.constant 0 : i32
    return %c0_i32, %c0_i32_0 : i32, i32
  }
  func.func @transform_2(%arg0: i32) -> (i32, i32) {
    %c0_i32 = arith.constant 0 : i32
    %c0_i32_0 = arith.constant 0 : i32
    %c0_i32_1 = arith.constant 0 : i32
    return %c0_i32, %c0_i32_0 : i32, i32
  }
  func.func @transform_3(%arg0: i32) -> (i32, i32) {
    %c0_i32 = arith.constant 0 : i32
    %c0_i32_0 = arith.constant 0 : i32
    %c0_i32_1 = arith.constant 0 : i32
    return %c0_i32, %c0_i32_0 : i32, i32
  }
  func.func @transform_4(%arg0: i32) -> (i32, i32) {
    %c0_i32 = arith.constant 0 : i32
    %c0_i32_0 = arith.constant 0 : i32
    %c0_i32_1 = arith.constant 0 : i32
    return %c0_i32, %c0_i32_0 : i32, i32
  }
  func.func @transform_5(%arg0: i32) -> (i32, i32) {
    %c0_i32 = arith.constant 0 : i32
    %c0_i32_0 = arith.constant 0 : i32
    return %arg0, %c0_i32 : i32, i32
  }
}

</mosaic_0001>

<llo_original>
// kernel: tpu_custom_call.1
$region0: #{tpu_custom_call.1}
  #allocation0 [shape = 'u32[]', space=smem, size = 0x4, offset = 0x4, fixed_abs, tag = 'smem constant byte address 0x4 - core index']
  #allocation1 [shape = 'u32[144,128]{1,0:T(1,128)}', space=vmem, size = 0x12000, scoped, tag = 'internal scratch']
  %s0 = inlined_call_operand.hbm [shape: f32[16,128], index: 0, kind: input, shape index: {}]
  %s1 = inlined_call_operand.hbm [shape: f32[128,256], index: 1, kind: input, shape index: {}]
  %s2 = inlined_call_operand.vmem [shape: f32[1,256], index: 2, kind: input, shape index: {}]
  %s3 = inlined_call_operand.hbm [shape: f32[256,128], index: 3, kind: input, shape index: {}]
  %s4 = inlined_call_operand.vmem [shape: f32[1,128], index: 4, kind: input, shape index: {}]
  %s5 = inlined_call_operand.hbm [shape: f32[16,128], index: 5, kind: output, shape index: {}]
  %s6 = sld [smem:[#allocation0]]
  $region42: #{tpu_custom_call.1} parent=0
    _
  %s8 = ssub.s32 1, %s6
  %s9 = scalar_select 0, %s8, %s6
  $region1: #{tpu_custom_call.1} parent=0
    #allocation2 [shape = 'u8[8192]{0}', space=vmem, size = 0x2000, scoped, tag = 'input window, operand 0, single buffered']
    #allocation3 [shape = 's32[1]{0}', space=sflag, size = 0x4, scoped, tag = 'scoped memory for tpu_custom_call.1']
    #allocation4 [shape = 's32[1]{0}', space=sflag, size = 0x4, scoped, tag = 'scoped memory for tpu_custom_call.1']
    #allocation5 [shape = 'u8[131072]{0}', space=vmem, size = 0x20000, scoped, tag = 'input window, operand 1, single buffered']
    #allocation6 [shape = 's32[1]{0}', space=sflag, size = 0x4, scoped, tag = 'scoped memory for tpu_custom_call.1']
    #allocation7 [shape = 'u8[131072]{0}', space=vmem, size = 0x20000, scoped, tag = 'input window, operand 3, single buffered']
    #allocation8 [shape = 'u8[8192]{0}', space=vmem, size = 0x2000, scoped, tag = 'output window, operand 0, single buffered']
    %10 = vsyncpa [#allocation3], 0
    %11 = vsyncpa [#allocation6], 0
    %12 = vsyncpa [#allocation4], 0
    // Predicated region
    $region2: #{tpu_custom_call.1} parent=1 // pred_check
      _
    $region3: #{tpu_custom_call.1} parent=1 // pred_check_branch
      %14 = sbr.rel (0) target = $region5
    $region4: #{tpu_custom_call.1} parent=1 // pred_region
      %s16 = ssub.s32 256, 256
      %17 = vsyncadd [#allocation3], %s16
      %s18 = sshll.u32 [#allocation2], 4
      %s19 = int_to_ptr.vmem [resolvable:$true] %s18
      %24 = dma.hbm_to_vmem [thread:$0]  %s0, 256, %s19, [#allocation3], 128, 128, 8
    $region5: #{tpu_custom_call.1} parent=1 // pred_fallthru
      _
    // Predicated region
    $region6: #{tpu_custom_call.1} parent=1 // pred_check
      _
    $region7: #{tpu_custom_call.1} parent=1 // pred_check_branch
      %26 = sbr.rel (0) target = $region9
    $region8: #{tpu_custom_call.1} parent=1 // pred_region
      %s28 = ssub.s32 4096, 4096
      %29 = vsyncadd [#allocation6], %s28
      %s30 = sshll.u32 [#allocation5], 4
      %s31 = int_to_ptr.vmem [resolvable:$true] %s30
      %36 = dma.hbm_to_vmem [thread:$0]  %s1, 4096, %s31, [#allocation6], 256, 256, 16
    $region9: #{tpu_custom_call.1} parent=1 // pred_fallthru
      _
    // Predicated region
    $region10: #{tpu_custom_call.1} parent=1 // pred_check
      _
    $region11: #{tpu_custom_call.1} parent=1 // pred_check_branch
      %38 = sbr.rel (0) target = $region13
    $region12: #{tpu_custom_call.1} parent=1 // pred_region
      _
    $region13: #{tpu_custom_call.1} parent=1 // pred_fallthru
      _
    // Predicated region
    $region14: #{tpu_custom_call.1} parent=1 // pred_check
      _
    $region15: #{tpu_custom_call.1} parent=1 // pred_check_branch
      %40 = sbr.rel (0) target = $region17
    $region16: #{tpu_custom_call.1} parent=1 // pred_region
      %s42 = ssub.s32 4096, 4096
      %43 = vsyncadd [#allocation6], %s42
      %s44 = sshll.u32 [#allocation7], 4
      %s45 = int_to_ptr.vmem [resolvable:$true] %s44
      %50 = dma.hbm_to_vmem [thread:$0]  %s3, 4096, %s45, [#allocation6], 128, 128, 8
    $region17: #{tpu_custom_call.1} parent=1 // pred_fallthru
      _
    // Predicated region
    $region18: #{tpu_custom_call.1} parent=1 // pred_check
      _
    $region19: #{tpu_custom_call.1} parent=1 // pred_check_branch
      %52 = sbr.rel (0) target = $region21
    $region20: #{tpu_custom_call.1} parent=1 // pred_region
      _
    $region21: #{tpu_custom_call.1} parent=1 // pred_fallthru
      _
    // Predicated region
    $region22: #{tpu_custom_call.1} parent=1 // pred_check
      _
    $region23: #{tpu_custom_call.1} parent=1 // pred_check_branch
      %54 = sbr.rel (0) target = $region25
    $region24: #{tpu_custom_call.1} parent=1 // pred_region
      %55 = dma.done [#allocation3], 256
    $region25: #{tpu_custom_call.1} parent=1 // pred_fallthru
      _
    // Predicated region
    $region26: #{tpu_custom_call.1} parent=1 // pred_check
      _
    $region27: #{tpu_custom_call.1} parent=1 // pred_check_branch
      %57 = sbr.rel (0) target = $region29
    $region28: #{tpu_custom_call.1} parent=1 // pred_region
      %58 = dma.done [#allocation6], 4096
    $region29: #{tpu_custom_call.1} parent=1 // pred_fallthru
      _
    // Predicated region
    $region30: #{tpu_custom_call.1} parent=1 // pred_check
      _
    $region31: #{tpu_custom_call.1} parent=1 // pred_check_branch
      %60 = sbr.rel (0) target = $region33
    $region32: #{tpu_custom_call.1} parent=1 // pred_region
      %61 = dma.done [#allocation6], 4096
    $region33: #{tpu_custom_call.1} parent=1 // pred_fallthru
      _
    %v62 = vld [vmem:[#allocation2] sm:$0xff]
    %v63 = vld [vmem:[#allocation2 + $0x8] sm:$0xff]
    %v64 = vld [vmem:[#allocation5] sm:$0xff]
    %v65 = vld [vmem:[#allocation5 + $0x8] sm:$0xff]
    %v66 = vld [vmem:[#allocation5 + $0x10] sm:$0xff]
    %v67 = vld [vmem:[#allocation5 + $0x18] sm:$0xff]
    %v68 = vld [vmem:[#allocation5 + $0x20] sm:$0xff]
    %v69 = vld [vmem:[#allocation5 + $0x28] sm:$0xff]
    %v70 = vld [vmem:[#allocation5 + $0x30] sm:$0xff]
    %v71 = vld [vmem:[#allocation5 + $0x38] sm:$0xff]
    %v72 = vld [vmem:[#allocation5 + $0x40] sm:$0xff]
    %v73 = vld [vmem:[#allocation5 + $0x48] sm:$0xff]
    %v74 = vld [vmem:[#allocation5 + $0x50] sm:$0xff]
    %v75 = vld [vmem:[#allocation5 + $0x58] sm:$0xff]
    %v76 = vld [vmem:[#allocation5 + $0x60] sm:$0xff]
    %v77 = vld [vmem:[#allocation5 + $0x68] sm:$0xff]
    %v78 = vld [vmem:[#allocation5 + $0x70] sm:$0xff]
    %v79 = vld [vmem:[#allocation5 + $0x78] sm:$0xff]
    %v80 = vld [vmem:[#allocation5 + $0x80] sm:$0xff]
    %v81 = vld [vmem:[#allocation5 + $0x88] sm:$0xff]
    %v82 = vld [vmem:[#allocation5 + $0x90] sm:$0xff]
    %v83 = vld [vmem:[#allocation5 + $0x98] sm:$0xff]
    %v84 = vld [vmem:[#allocation5 + $0xa0] sm:$0xff]
    %v85 = vld [vmem:[#allocation5 + $0xa8] sm:$0xff]
    %v86 = vld [vmem:[#allocation5 + $0xb0] sm:$0xff]
    %v87 = vld [vmem:[#allocation5 + $0xb8] sm:$0xff]
    %v88 = vld [vmem:[#allocation5 + $0xc0] sm:$0xff]
    %v89 = vld [vmem:[#allocation5 + $0xc8] sm:$0xff]
    %v90 = vld [vmem:[#allocation5 + $0xd0] sm:$0xff]
    %v91 = vld [vmem:[#allocation5 + $0xd8] sm:$0xff]
    %v92 = vld [vmem:[#allocation5 + $0xe0] sm:$0xff]
    %v93 = vld [vmem:[#allocation5 + $0xe8] sm:$0xff]
    %v94 = vld [vmem:[#allocation5 + $0xf0] sm:$0xff]
    %v95 = vld [vmem:[#allocation5 + $0xf8] sm:$0xff]
    %v96 = vld [vmem:[%s2] sm:$0x3]
    %v98 = vlaneseq
    %v99 = vshrl.u32 %v98, 7
    %v100 = vsub.s32 0, %v99
    %v101 = vrot.slane %v96, %v100
    %v102 = vlaneseq
    %v103 = vshrl.u32 %v102, 7
    %v104 = vsub.s32 1, %v103
    %v105 = vrot.slane %v96, %v104
    %108 = vmatprep.subr.mxu0 %v95
    %109 = vmatpush1.msra.mxu0 %v94
    %110 = vmatprep.subr.mxu0 %v93
    %111 = vmatpush1.msra.mxu0 %v92
    %112 = vmatprep.subr.mxu0 %v91
    %113 = vmatpush1.msra.mxu0 %v90
    %114 = vmatprep.subr.mxu0 %v89
    %115 = vmatpush1.msra.mxu0 %v88
    %116 = vmatprep.subr.mxu0 %v87
    %117 = vmatpush1.msra.mxu0 %v86
    %118 = vmatprep.subr.mxu0 %v85
    %119 = vmatpush1.msra.mxu0 %v84
    %120 = vmatprep.subr.mxu0 %v83
    %121 = vmatpush1.msra.mxu0 %v82
    %122 = vmatprep.subr.mxu0 %v81
    %123 = vmatpush1.msra.mxu0 %v80
    %124 = vmatprep.subr.mxu0 %v79
    %125 = vmatpush1.msra.mxu0 %v78
    %126 = vmatprep.subr.mxu0 %v77
    %127 = vmatpush1.msra.mxu0 %v76
    %128 = vmatprep.subr.mxu0 %v75
    %129 = vmatpush1.msra.mxu0 %v74
    %130 = vmatprep.subr.mxu0 %v73
    %131 = vmatpush1.msra.mxu0 %v72
    %132 = vmatprep.subr.mxu0 %v71
    %133 = vmatpush1.msra.mxu0 %v70
    %134 = vmatprep.subr.mxu0 %v69
    %135 = vmatpush1.msra.mxu0 %v68
    %136 = vmatprep.subr.mxu0 %v67
    %137 = vmatpush1.msra.mxu0 %v66
    %138 = vmatprep.subr.mxu0 %v65
    %139 = vmatpush1.msra.mxu0 %v64
    %140 = vmatprep.subr.mxu0 0.0
    %141 = vmatpush2.msra.mxu0 0.0
    %142 = vmatprep.subr.mxu0 0.0
    %143 = vmatpush2.msra.mxu0 0.0
    %144 = vmatprep.subr.mxu0 0.0
    %145 = vmatpush2.msra.mxu0 0.0
    %146 = vmatprep.subr.mxu0 0.0
    %147 = vmatpush2.msra.mxu0 0.0
    %148 = vmatprep.subr.mxu0 0.0
    %149 = vmatpush2.msra.mxu0 0.0
    %150 = vmatprep.subr.mxu0 0.0
    %151 = vmatpush2.msra.mxu0 0.0
    %152 = vmatprep.subr.mxu0 0.0
    %153 = vmatpush2.msra.mxu0 0.0
    %154 = vmatprep.subr.mxu0 0.0
    %155 = vmatpush2.msra.mxu0 0.0
    %156 = vmatprep.subr.mxu0 0.0
    %157 = vmatpush2.msra.mxu0 0.0
    %158 = vmatprep.subr.mxu0 0.0
    %159 = vmatpush2.msra.mxu0 0.0
    %160 = vmatprep.subr.mxu0 0.0
    %161 = vmatpush2.msra.mxu0 0.0
    %162 = vmatprep.subr.mxu0 0.0
    %163 = vmatpush2.msra.mxu0 0.0
    %164 = vmatprep.subr.mxu0 0.0
    %165 = vmatpush2.msra.mxu0 0.0
    %166 = vmatprep.subr.mxu0 0.0
    %167 = vmatpush2.msra.mxu0 0.0
    %168 = vmatprep.subr.mxu0 0.0
    %169 = vmatpush2.msra.mxu0 0.0
    %170 = vmatprep.subr.mxu0 0.0
    %171 = vmatpush2.msra.mxu0 0.0
    %172 = vmatprep.mubr.f32.mxu0 0.0
    %173 = vmatmul.mubr.f32.gmra.mxu0 %v62
    %v174 = vpop.f32.mrf.mxu0
    %v175 = vadd.f32 %v101, %v174
    %v176 = vpop.f32.mrf.mxu0
    %v177 = vadd.f32 %v105, %v176
    %178 = vmatprep.mubr.f32.mxu0 0.0
    %179 = vmatmul.mubr.f32.gmra.mxu0 %v63
    %v180 = vpop.f32.mrf.mxu0
    %v181 = vadd.f32 %v101, %v180
    %v182 = vpop.f32.mrf.mxu0
    %v183 = vadd.f32 %v105, %v182
    %184 = vdwg.mxu0
    %v185 = vmax.f32 %v175, 0.0
    %v186 = vmax.f32 %v177, 0.0
    %v187 = vmax.f32 %v181, 0.0
    %v188 = vmax.f32 %v183, 0.0
    %v189 = vld [vmem:[#allocation7] sm:$0xff]
    %v190 = vld [vmem:[#allocation7 + $0x8] sm:$0xff]
    %v191 = vld [vmem:[#allocation7 + $0x10] sm:$0xff]
    %v192 = vld [vmem:[#allocation7 + $0x18] sm:$0xff]
    %v193 = vld [vmem:[#allocation7 + $0x20] sm:$0xff]
    %v194 = vld [vmem:[#allocation7 + $0x28] sm:$0xff]
    %v195 = vld [vmem:[#allocation7 + $0x30] sm:$0xff]
    %v196 = vld [vmem:[#allocation7 + $0x38] sm:$0xff]
    %v197 = vld [vmem:[#allocation7 + $0x40] sm:$0xff]
    %v198 = vld [vmem:[#allocation7 + $0x48] sm:$0xff]
    %v199 = vld [vmem:[#allocation7 + $0x50] sm:$0xff]
    %v200 = vld [vmem:[#allocation7 + $0x58] sm:$0xff]
    %v201 = vld [vmem:[#allocation7 + $0x60] sm:$0xff]
    %v202 = vld [vmem:[#allocation7 + $0x68] sm:$0xff]
    %v203 = vld [vmem:[#allocation7 + $0x70] sm:$0xff]
    %v204 = vld [vmem:[#allocation7 + $0x78] sm:$0xff]
    %v205 = vld [vmem:[#allocation7 + $0x80] sm:$0xff]
    %v206 = vld [vmem:[#allocation7 + $0x88] sm:$0xff]
    %v207 = vld [vmem:[#allocation7 + $0x90] sm:$0xff]
    %v208 = vld [vmem:[#allocation7 + $0x98] sm:$0xff]
    %v209 = vld [vmem:[#allocation7 + $0xa0] sm:$0xff]
    %v210 = vld [vmem:[#allocation7 + $0xa8] sm:$0xff]
    %v211 = vld [vmem:[#allocation7 + $0xb0] sm:$0xff]
    %v212 = vld [vmem:[#allocation7 + $0xb8] sm:$0xff]
    %v213 = vld [vmem:[#allocation7 + $0xc0] sm:$0xff]
    %v214 = vld [vmem:[#allocation7 + $0xc8] sm:$0xff]
    %v215 = vld [vmem:[#allocation7 + $0xd0] sm:$0xff]
    %v216 = vld [vmem:[#allocation7 + $0xd8] sm:$0xff]
    %v217 = vld [vmem:[#allocation7 + $0xe0] sm:$0xff]
    %v218 = vld [vmem:[#allocation7 + $0xe8] sm:$0xff]
    %v219 = vld [vmem:[#allocation7 + $0xf0] sm:$0xff]
    %v220 = vld [vmem:[#allocation7 + $0xf8] sm:$0xff]
    %v221 = vld [vmem:[%s4] sm:$0x1]
    %v223 = vlaneseq
    %v224 = vshrl.u32 %v223, 7
    %v225 = vsub.s32 0, %v224
    %v226 = vrot.slane %v221, %v225
    %228 = vmatprep.subr.mxu0 0.0
    %229 = vmatpush1.msra.mxu0 %v204
    %230 = vmatprep.subr.mxu0 0.0
    %231 = vmatpush1.msra.mxu0 %v203
    %232 = vmatprep.subr.mxu0 0.0
    %233 = vmatpush1.msra.mxu0 %v202
    %234 = vmatprep.subr.mxu0 0.0
    %235 = vmatpush1.msra.mxu0 %v201
    %236 = vmatprep.subr.mxu0 0.0
    %237 = vmatpush1.msra.mxu0 %v200
    %238 = vmatprep.subr.mxu0 0.0
    %239 = vmatpush1.msra.mxu0 %v199
    %240 = vmatprep.subr.mxu0 0.0
    %241 = vmatpush1.msra.mxu0 %v198
    %242 = vmatprep.subr.mxu0 0.0
    %243 = vmatpush1.msra.mxu0 %v197
    %244 = vmatprep.subr.mxu0 0.0
    %245 = vmatpush1.msra.mxu0 %v196
    %246 = vmatprep.subr.mxu0 0.0
    %247 = vmatpush1.msra.mxu0 %v195
    %248 = vmatprep.subr.mxu0 0.0
    %249 = vmatpush1.msra.mxu0 %v194
    %250 = vmatprep.subr.mxu0 0.0
    %251 = vmatpush1.msra.mxu0 %v193
    %252 = vmatprep.subr.mxu0 0.0
    %253 = vmatpush1.msra.mxu0 %v192
    %254 = vmatprep.subr.mxu0 0.0
    %255 = vmatpush1.msra.mxu0 %v191
    %256 = vmatprep.subr.mxu0 0.0
    %257 = vmatpush1.msra.mxu0 %v190
    %258 = vmatprep.subr.mxu0 0.0
    %259 = vmatpush1.msra.mxu0 %v189
    %260 = vmatprep.subr.mxu0 0.0
    %261 = vmatpush2.msra.mxu0 %v220
    %262 = vmatprep.subr.mxu0 0.0
    %263 = vmatpush2.msra.mxu0 %v219
    %264 = vmatprep.subr.mxu0 0.0
    %265 = vmatpush2.msra.mxu0 %v218
    %266 = vmatprep.subr.mxu0 0.0
    %267 = vmatpush2.msra.mxu0 %v217
    %268 = vmatprep.subr.mxu0 0.0
    %269 = vmatpush2.msra.mxu0 %v216
    %270 = vmatprep.subr.mxu0 0.0
    %271 = vmatpush2.msra.mxu0 %v215
    %272 = vmatprep.subr.mxu0 0.0
    %273 = vmatpush2.msra.mxu0 %v214
    %274 = vmatprep.subr.mxu0 0.0
    %275 = vmatpush2.msra.mxu0 %v213
    %276 = vmatprep.subr.mxu0 0.0
    %277 = vmatpush2.msra.mxu0 %v212
    %278 = vmatprep.subr.mxu0 0.0
    %279 = vmatpush2.msra.mxu0 %v211
    %280 = vmatprep.subr.mxu0 0.0
    %281 = vmatpush2.msra.mxu0 %v210
    %282 = vmatprep.subr.mxu0 0.0
    %283 = vmatpush2.msra.mxu0 %v209
    %284 = vmatprep.subr.mxu0 0.0
    %285 = vmatpush2.msra.mxu0 %v208
    %286 = vmatprep.subr.mxu0 0.0
    %287 = vmatpush2.msra.mxu0 %v207
    %288 = vmatprep.subr.mxu0 0.0
    %289 = vmatpush2.msra.mxu0 %v206
    %290 = vmatprep.subr.mxu0 0.0
    %291 = vmatpush2.msra.mxu0 %v205
    %292 = vmatprep.mubr.f32.mxu0 %v186
    %293 = vmatmul.mubr.f32.gmra.mxu0 %v185
    %v294 = vpop.f32.mrf.mxu0
    %v295 = vadd.f32 %v226, %v294
    %v296 = vpop.f32.mrf.mxu0
    %297 = vmatprep.mubr.f32.mxu0 %v188
    %298 = vmatmul.mubr.f32.gmra.mxu0 %v187
    %v299 = vpop.f32.mrf.mxu0
    %v300 = vadd.f32 %v226, %v299
    %v301 = vpop.f32.mrf.mxu0
    %302 = vdwg.mxu0
    %303 = vst [vmem:[#allocation8] sm:$0xff] %v295
    %304 = vst [vmem:[#allocation8 + $0x8] sm:$0xff] %v300
    // Predicated region
    $region34: #{tpu_custom_call.1} parent=1 // pred_check
      _
    $region35: #{tpu_custom_call.1} parent=1 // pred_check_branch
      %306 = sbr.rel (0) target = $region37
    $region36: #{tpu_custom_call.1} parent=1 // pred_region
      %s308 = ssub.s32 256, 256
      %309 = vsyncadd [#allocation4], %s308
      %s310 = sshll.u32 [#allocation8], 4
      %s311 = int_to_ptr.vmem [resolvable:$true] %s310
      %316 = dma.vmem_to_hbm [thread:$0]  %s311, 256, %s5, [#allocation4], 128, 128, 8
    $region37: #{tpu_custom_call.1} parent=1 // pred_fallthru
      _
    // Predicated region
    $region38: #{tpu_custom_call.1} parent=1 // pred_check
      _
    $region39: #{tpu_custom_call.1} parent=1 // pred_check_branch
      %318 = sbr.rel (0) target = $region41
    $region40: #{tpu_custom_call.1} parent=1 // pred_region
      %319 = dma.done [#allocation4], 256
    $region41: #{tpu_custom_call.1} parent=1 // pred_fallthru
      _
    %320 = vsyncpa [#allocation3], 1
    %321 = vsyncpa [#allocation6], 1
    %322 = vsyncpa [#allocation4], 1

</llo_original>
